<compile_context>
chip_gen: v6e
topology: v6e:2x2x1
jax: 0.10.0
libtpu: 0.0.40
codegen_flags: <defaults>
</compile_context>

<pallas_src>
import jax
import jax.numpy as jnp
from jax import lax
from jax.experimental import pallas as pl
from jax.experimental.pallas import tpu as pltpu


# ----------------------------------------------------------------------------
# helpers
# ----------------------------------------------------------------------------
def _round_up(n, m):
    return (n + m - 1) // m * m


def _pad_to(arr, shape):
    pads = [(0, s - d) for d, s in zip(arr.shape, shape)]
    if any(p[1] for p in pads):
        return jnp.pad(arr, pads)
    return arr


def _itemsize(dt):
    return jnp.dtype(dt).itemsize


def _divisor_tiles(n, cands):
    out = [c for c in cands if c <= n and n % c == 0]
    return out if out else [n]


def _tpu_vmem_and_cores():
    """(per-core VMEM bytes, #TensorCores per chip) with safe fallbacks."""
    vmem = 128 << 20
    try:
        info = pltpu.get_tpu_info()
        vmem = int(getattr(info, "vmem_capacity_bytes", vmem))
    except Exception:
        pass
    # v7x: 64 MiB VMEM per TC and 2 TCs/chip; v5e/v6e: 128 MiB, 1 TC.
    num_tc = 2 if vmem <= (64 << 20) else 1
    return vmem, num_tc


def _gen_vmem_limit(vmem_capacity):
    # v7x (64 MiB physical): cap the scoped limit at 48 MiB.
    # v5e/v6e (128 MiB physical): raise it to 96 MiB so blocks can be large.
    if vmem_capacity <= (64 << 20):
        return 48 << 20
    return 96 << 20


# ----------------------------------------------------------------------------
# parallel tiled matmul + bias (input & vocab projections)
# ----------------------------------------------------------------------------
def _matmul_bias_kernel(a_ref, b_ref, bias_ref, o_ref):
    o_ref[...] = (jnp.dot(a_ref[...], b_ref[...],
                          preferred_element_type=jnp.float32)
                  + bias_ref[...]).astype(o_ref.dtype)


def _matmul_bias_k_kernel(a_ref, b_ref, bias_ref, o_ref, acc_ref):
    k = pl.program_id(2)

    @pl.when(k == 0)
    def _():
        acc_ref[...] = jnp.zeros_like(acc_ref)

    acc_ref[...] += jnp.dot(a_ref[...], b_ref[...],
                            preferred_element_type=jnp.float32)

    @pl.when(k == pl.num_programs(2) - 1)
    def _():
        o_ref[...] = (acc_ref[...] + bias_ref[...]).astype(o_ref.dtype)


def _matmul_bias_ktiled(a, b, bias, out_dtype, vmem_limit):
    """K-tiled fallback (accumulator scratch) for very large contraction dims."""
    M, K = a.shape
    _, N = b.shape
    a_b, b_b, o_b = _itemsize(a.dtype), _itemsize(b.dtype), _itemsize(out_dtype)
    budget = int(vmem_limit * 0.8)
    tm = _divisor_tiles(M, (256, 128, 64, 32, 16, 8))[0]
    tn = _divisor_tiles(N, (512, 256, 128))[0]
    tk_cands = _divisor_tiles(K, (4096, 2048, 1024, 512, 256, 128))
    tk = tk_cands[-1]
    for c in tk_cands:
        if 2 * (tm * c * a_b + c * tn * b_b + tn * 4) + tm * tn * (4 + 2 * o_b) <= budget:
            tk = c
            break
    return pl.pallas_call(
        _matmul_bias_k_kernel,
        out_shape=jax.ShapeDtypeStruct((M, N), out_dtype),
        grid_spec=pltpu.PrefetchScalarGridSpec(
            num_scalar_prefetch=0,
            grid=(M // tm, N // tn, K // tk),
            in_specs=[
                pl.BlockSpec((tm, tk), lambda i, j, k: (i, k)),
                pl.BlockSpec((tk, tn), lambda i, j, k: (k, j)),
                pl.BlockSpec((1, tn), lambda i, j, k: (0, j)),
            ],
            out_specs=pl.BlockSpec((tm, tn), lambda i, j, k: (i, j)),
            scratch_shapes=[pltpu.VMEM((tm, tn), jnp.float32)],
        ),
        compiler_params=pltpu.CompilerParams(
            dimension_semantics=("parallel", "parallel", "arbitrary"),
            vmem_limit_bytes=vmem_limit),
    )(a, b, bias)


def _matmul_bias(a, b, bias, out_dtype, vmem_limit):
    """a: (M, K) @ b: (K, N) + bias: (1, N) -> (M, N), VMEM-budgeted tiles."""
    M, K = a.shape
    _, N = b.shape
    a_b, b_b, o_b = _itemsize(a.dtype), _itemsize(b.dtype), _itemsize(out_dtype)
    budget = int(vmem_limit * 0.8)

    tm_cands = _divisor_tiles(M, (2048, 1024, 512, 256, 128, 64, 32, 16, 8))
    tn_cands = _divisor_tiles(N, (2048, 1024, 512, 256, 128))

    def fits(tm, tn):
        return (2 * (tm * K * a_b + K * tn * b_b + tn * 4)
                + 2 * tm * tn * o_b) <= budget

    best = None
    for tn in tn_cands:                 # descending
        for tm in tm_cands:             # descending; first fit = largest tm
            if fits(tm, tn):
                key = (tm * tn, tn)
                if best is None or key > best[0]:
                    best = (key, tm, tn)
                break
    if best is None:
        # Even the smallest (tm, K)+(K, tn) pair blows VMEM -> tile K.
        return _matmul_bias_ktiled(a, b, bias, out_dtype, vmem_limit)
    _, tm, tn = best

    # Pin the *larger* operand to the outer grid axis only, so it is DMA'd from
    # HBM exactly once while the smaller operand is re-streamed.
    if K * N * b_b >= M * K * a_b:
        grid = (N // tn, M // tm)
        a_spec = pl.BlockSpec((tm, K), lambda j, i: (i, 0))
        b_spec = pl.BlockSpec((K, tn), lambda j, i: (0, j))
        bias_spec = pl.BlockSpec((1, tn), lambda j, i: (0, j))
        out_spec = pl.BlockSpec((tm, tn), lambda j, i: (i, j))
    else:
        grid = (M // tm, N // tn)
        a_spec = pl.BlockSpec((tm, K), lambda i, j: (i, 0))
        b_spec = pl.BlockSpec((K, tn), lambda i, j: (0, j))
        bias_spec = pl.BlockSpec((1, tn), lambda i, j: (0, j))
        out_spec = pl.BlockSpec((tm, tn), lambda i, j: (i, j))

    return pl.pallas_call(
        _matmul_bias_kernel,
        out_shape=jax.ShapeDtypeStruct((M, N), out_dtype),
        grid_spec=pltpu.PrefetchScalarGridSpec(
            num_scalar_prefetch=0,
            grid=grid,
            in_specs=[a_spec, b_spec, bias_spec],
            out_specs=out_spec,
        ),
        compiler_params=pltpu.CompilerParams(
            dimension_semantics=("parallel", "parallel"),
            vmem_limit_bytes=vmem_limit),
    )(a, b, bias)


# ----------------------------------------------------------------------------
# recurrent kernel: per (batch-tile, time-chunk) grid step, Tc LSTM steps
# ----------------------------------------------------------------------------
def _lstm_recurrent_kernel(xproj_ref, h0_ref, whh_ref,
                           hs_ref, hlast_ref,
                           h_sc, c_sc):
    tc = pl.program_id(1)               # inner, sequential ("arbitrary") axis
    Hp = h_sc.shape[-1]
    Tc = xproj_ref.shape[0]

    @pl.when(tc == 0)
    def _():
        # cell state starts at zero, exactly like torch.zeros(hidden.shape)
        h_sc[...] = h0_ref[0].astype(jnp.float32)
        c_sc[...] = jnp.zeros_like(c_sc)

    whh = whh_ref[...]                  # (Hp, 4*Hp), resident across the chunk

    def step(i, carry):
        h, c = carry
        # x @ W_ih^T + bias is precomputed (xproj); only h @ W_hh^T per step.
        # Note: h is rounded to the weight dtype for the MXU; the h/c carry
        # itself stays f32 so rounding does not compound in the state.
        gates = xproj_ref[i].astype(jnp.float32) + jnp.dot(
            h.astype(whh.dtype), whh, preferred_element_type=jnp.float32)
        # PyTorch gate order: i, f, g, o  (each gate is a 128-aligned slab)
        i_g = jax.nn.sigmoid(gates[:, 0 * Hp:1 * Hp])
        f_g = jax.nn.sigmoid(gates[:, 1 * Hp:2 * Hp])
        g_g = jnp.tanh(gates[:, 2 * Hp:3 * Hp])
        o_g = jax.nn.sigmoid(gates[:, 3 * Hp:4 * Hp])
        c = f_g * c + i_g * g_g
        h = o_g * jnp.tanh(c)
        hs_ref[i] = h.astype(hs_ref.dtype)
        return h, c

    h, c = lax.fori_loop(0, Tc, step, (h_sc[...], c_sc[...]), unroll=True)
    h_sc[...] = h
    c_sc[...] = c

    # final hidden state: write only once, on the last time chunk
    @pl.when(tc == pl.num_programs(1) - 1)
    def _():
        hlast_ref[0] = h.astype(hlast_ref.dtype)


def _pick_recurrent_tiles(T, Bp, Hp, xp_bytes, hs_bytes, w_bytes,
                          budget, num_tc, granule):
    """VMEM-budgeted (TB, Tc) pick; Tc capped at 16 (full unroll)."""
    tc_cands = [c for c in (16, 8, 4, 2, 1) if c <= T and T % c == 0]
    tb_all = sorted({c for c in ((Bp,) + (1024, 512, 256, 128, 64, 32, 16, 8))
                     if c <= Bp and Bp % c == 0 and c % granule == 0},
                    reverse=True) or [Bp]
    if num_tc >= 2 and Bp >= 2 * granule:
        # v7x: make sure both TensorCores get a batch tile.
        split = [c for c in tb_all if c <= (Bp + 1) // 2]
        tb_cands = split if split else tb_all
    else:
        # single-TC chips: prefer one big batch tile (fills the MXU M dim).
        tb_cands = tb_all

    w_fixed = Hp * 4 * Hp * w_bytes            # W_hh^T, single-buffered
    for TB in tb_cands:                        # largest TB first
        fixed = (w_fixed
                 + TB * Hp * 4                 # h0 block (single-buffered)
                 + 2 * TB * Hp * 4             # h/c scratch (f32)
                 + 2 * TB * Hp * 4)            # h_last output block
        for Tc in tc_cands:                    # largest Tc first
            stream = (2 * Tc * TB * 4 * Hp * xp_bytes   # xproj in (dbl-buf)
                      + 2 * Tc * TB * Hp * hs_bytes)    # hs out  (dbl-buf)
            if fixed + stream <= budget:
                return TB, Tc
    return tb_cands[-1], tc_cands[-1]


# ----------------------------------------------------------------------------
# wrapper
# ----------------------------------------------------------------------------
def lstm_cell_decoder(x, h0, params, weight_dtype=jnp.bfloat16):
    """x: (T, B, D) f32, h0: (1, B, H) f32.
    Returns (logits (T, B, V) f32, h_final (1, B, H) f32)."""
    T, B, D = x.shape
    H = h0.shape[-1]
    V = params["w_v"].shape[0]

    vmem_cap, num_tc = _tpu_vmem_and_cores()
    vmem_limit = _gen_vmem_limit(vmem_cap)

    # lane/sublane padding: per-gate hidden -> 128 lanes, vocab -> 128 lanes,
    # batch -> full sublane pack of the stored activation dtype (16 for bf16).
    granule = 8 if _itemsize(weight_dtype) >= 4 else 16
    Hp = _round_up(H, 128)
    Bp = _round_up(B, granule)
    Vp = _round_up(V, 128)

    # --- weights, transposed for right-multiplication, padded per gate ------
    w_ih_t = jnp.transpose(params["w_ih"].reshape(4, H, D), (2, 0, 1))  # (D,4,H)
    w_ih_t = _pad_to(w_ih_t, (D, 4, Hp)).reshape(D, 4 * Hp)
    w_hh_t = jnp.transpose(params["w_hh"].reshape(4, H, H), (2, 0, 1))  # (H,4,H)
    w_hh_t = _pad_to(w_hh_t, (H, 4, Hp)).reshape(H, 4 * Hp)
    w_hh_t = _pad_to(w_hh_t, (Hp, 4 * Hp))
    bias = _pad_to((params["b_ih"] + params["b_hh"]).reshape(4, H),
                   (4, Hp)).reshape(1, 4 * Hp)
    w_v_t = _pad_to(params["w_v"].T, (Hp, Vp))
    b_v = _pad_to(params["b_v"].reshape(1, V), (1, Vp))

    x_p = _pad_to(x, (T, Bp, D))
    h0_p = _pad_to(h0, (1, Bp, Hp))

    # --- 1) input projection: one big parallel MXU matmul --------------------
    # Stored in weight_dtype (bf16 path): halves the HBM stream feeding the
    # memory-bound recurrence and halves its double-buffered VMEM block.
    xproj = _matmul_bias(
        x_p.reshape(T * Bp, D).astype(weight_dtype),
        w_ih_t.astype(weight_dtype),
        bias,                                    # f32 bias folded in here
        weight_dtype,
        vmem_limit,
    ).reshape(T, Bp, 4 * Hp)

    # --- 2) recurrence: time chunked, batch-tiled (parallel for megacore) ----
    hs_dtype = weight_dtype
    TB, Tc = _pick_recurrent_tiles(
        T, Bp, Hp,
        xp_bytes=_itemsize(weight_dtype), hs_bytes=_itemsize(hs_dtype),
        w_bytes=_itemsize(weight_dtype),
        budget=int(vmem_limit * 0.8), num_tc=num_tc, granule=granule)

    w_hh_dev = w_hh_t.astype(weight_dtype)

    def run_recurrence(single_buffer_invariants):
        # grid-invariant inputs (h0, W_hh) don't need double buffering
        pm = ({"pipeline_mode": pl.Buffered(1)}
              if single_buffer_invariants else {})
        return pl.pallas_call(
            _lstm_recurrent_kernel,
            out_shape=(
                jax.ShapeDtypeStruct((T, Bp, Hp), hs_dtype),     # h_t sequence
                jax.ShapeDtypeStruct((1, Bp, Hp), jnp.float32),  # final hidden
            ),
            grid_spec=pltpu.PrefetchScalarGridSpec(
                num_scalar_prefetch=0,
                grid=(Bp // TB, T // Tc),
                in_specs=[
                    pl.BlockSpec((Tc, TB, 4 * Hp), lambda bt, tc: (tc, bt, 0)),
                    pl.BlockSpec((1, TB, Hp), lambda bt, tc: (0, bt, 0), **pm),
                    pl.BlockSpec((Hp, 4 * Hp), lambda bt, tc: (0, 0), **pm),
                ],
                out_specs=[
                    pl.BlockSpec((Tc, TB, Hp), lambda bt, tc: (tc, bt, 0)),
                    pl.BlockSpec((1, TB, Hp), lambda bt, tc: (0, bt, 0)),
                ],
                scratch_shapes=[
                    pltpu.VMEM((TB, Hp), jnp.float32),   # h state (f32 carry)
                    pltpu.VMEM((TB, Hp), jnp.float32),   # c state (f32 carry)
                ],
            ),
            compiler_params=pltpu.CompilerParams(
                dimension_semantics=("parallel", "arbitrary"),
                vmem_limit_bytes=vmem_limit),
        )(xproj, h0_p, w_hh_dev)

    try:
        hs, h_last = run_recurrence(True)
    except Exception:
        # pipeline_mode / Buffered(1) unsupported on this jax version:
        # fall back to default double-buffering of the invariant inputs.
        hs, h_last = run_recurrence(False)

    # --- 3) vocab projection: parallel MXU matmul; W_v^T loaded from HBM once
    logits_p = _matmul_bias(
        hs.reshape(T * Bp, Hp),
        w_v_t.astype(weight_dtype),
        b_v,
        jnp.float32,
        vmem_limit,
    ).reshape(T, Bp, Vp)

    logits = logits_p[:, :B, :V]
    h_final = h_last[:, :B, :H]
    return logits, h_final


# ----------------------------------------------------------------------------
# pure-JAX reference (matches PyTorch nn.LSTM + Linear semantics)
# ----------------------------------------------------------------------------
def lstm_cell_decoder_ref(x, h0, params):
    H = h0.shape[-1]
    wih, whh = params["w_ih"], params["w_hh"]
    b = params["b_ih"] + params["b_hh"]

    def step(carry, x_t):
        h, c = carry
        gates = x_t @ wih.T + h @ whh.T + b
        i = jax.nn.sigmoid(gates[:, 0 * H:1 * H])
        f = jax.nn.sigmoid(gates[:, 1 * H:2 * H])
        g = jnp.tanh(gates[:, 2 * H:3 * H])
        o = jax.nn.sigmoid(gates[:, 3 * H:4 * H])
        c = f * c + i * g
        h = o * jnp.tanh(c)
        return (h, c), h

    (h_f, _), hs = lax.scan(step, (h0[0], jnp.zeros_like(h0[0])), x)
    logits = hs @ params["w_v"].T + params["b_v"]
    return logits, h_f[None]


def init_params(key, dim, hidden_dim, vocab_size):
    ks = jax.random.split(key, 6)
    k = 1.0 / jnp.sqrt(hidden_dim)
    u = lambda kk, shape, s: jax.random.uniform(kk, shape, jnp.float32, -s, s)
    return {
        "w_ih": u(ks[0], (4 * hidden_dim, dim), k),
        "w_hh": u(ks[1], (4 * hidden_dim, hidden_dim), k),
        "b_ih": u(ks[2], (4 * hidden_dim,), k),
        "b_hh": u(ks[3], (4 * hidden_dim,), k),
        "w_v": u(ks[4], (vocab_size, hidden_dim), k),
        "b_v": u(ks[5], (vocab_size,), k),
    }


if __name__ == "__main__":
    T, B, D, H, V = 8, 8, 32, 32, 128

    key = jax.random.PRNGKey(0)
    k_x, k_h, k_p = jax.random.split(key, 3)
    x = jax.random.normal(k_x, (T, B, D), jnp.float32)
    h0 = jax.random.normal(k_h, (1, B, H), jnp.float32)
    params = init_params(k_p, D, H, V)

    ref_logits, ref_h = lstm_cell_decoder_ref(x, h0, params)

    # f32 path: exact parity with the reference.
    logits32, h32 = jax.block_until_ready(
        lstm_cell_decoder(x, h0, params, weight_dtype=jnp.float32))
    assert jnp.allclose(logits32, ref_logits, atol=1e-4, rtol=1e-4)
    assert jnp.allclose(h32, ref_h, atol=1e-4, rtol=1e-4)

    # bf16-weight/activation path (MXU rate, halved xproj/hs DMA): looser tol.
    logits16, h16 = jax.block_until_ready(
        lstm_cell_decoder(x, h0, params, weight_dtype=jnp.bfloat16))
    assert jnp.allclose(logits16, ref_logits, atol=5e-2, rtol=5e-2)
    assert jnp.allclose(h16, ref_h, atol=5e-2, rtol=5e-2)

    print("KERNEL_OK")
</pallas_src>

<mosaic_0001>
module attributes {stable_mosaic.version = 11 : i64} {
  func.func @_matmul_bias_kernel(%arg0: i32, %arg1: i32, %arg2: memref<64x32xf32, #tpu.memory_space<vmem>>, %arg3: memref<32x512xf32, #tpu.memory_space<vmem>>, %arg4: memref<1x512xf32, #tpu.memory_space<vmem>>, %arg5: memref<64x512xf32, #tpu.memory_space<vmem>>) attributes {dimension_semantics = [#tpu.dimension_semantics<parallel>, #tpu.dimension_semantics<parallel>], iteration_bounds = array<i64: 1, 1>, scalar_prefetch = 0 : i64, scratch_operands = 0 : i64, tpu.core_type = #tpu.core_type<tc>, window_params = [{transform_indices = @transform_0, window_bounds = array<i64: 64, 32>}, {transform_indices = @transform_1, window_bounds = array<i64: 32, 512>}, {transform_indices = @transform_2, window_bounds = array<i64: 1, 512>}, {transform_indices = @transform_3, window_bounds = array<i64: 64, 512>}]} {
    %c0 = arith.constant 0 : index
    %c0_0 = arith.constant 0 : index
    %0 = vector.load %arg2[%c0, %c0_0] : memref<64x32xf32, #tpu.memory_space<vmem>>, vector<64x32xf32>
    %c0_1 = arith.constant 0 : index
    %c0_2 = arith.constant 0 : index
    %1 = vector.load %arg3[%c0_1, %c0_2] : memref<32x512xf32, #tpu.memory_space<vmem>>, vector<32x512xf32>
    %cst = arith.constant dense<0.000000e+00> : vector<64x512xf32>
    %2 = tpu.matmul %0, %1, %cst {dimension_numbers = #tpu.dot_dimension_numbers<[1], [0], [0], [1], [0, 0, 1, 1], [], []>} : vector<64x32xf32>, vector<32x512xf32>, vector<64x512xf32> -> vector<64x512xf32>
    %c0_3 = arith.constant 0 : index
    %c0_4 = arith.constant 0 : index
    %3 = vector.load %arg4[%c0_3, %c0_4] : memref<1x512xf32, #tpu.memory_space<vmem>>, vector<1x512xf32>
    %4 = vector.broadcast %3 : vector<1x512xf32> to vector<64x512xf32>
    %5 = arith.addf %2, %4 : vector<64x512xf32>
    %c0_5 = arith.constant 0 : index
    %c0_6 = arith.constant 0 : index
    %6 = vector.load %arg5[%c0_5, %c0_6] : memref<64x512xf32, #tpu.memory_space<vmem>>, vector<64x512xf32>
    tpu.vector_store %arg5[%c0_5, %c0_6], %5 {strides = array<i32>} : memref<64x512xf32, #tpu.memory_space<vmem>>, vector<64x512xf32>,
    return
  }
  func.func @transform_0(%arg0: i32, %arg1: i32) -> (i32, i32) {
    %c0_i32 = arith.constant 0 : i32
    %c0_i32_0 = arith.constant 0 : i32
    return %arg1, %c0_i32 : i32, i32
  }
  func.func @transform_1(%arg0: i32, %arg1: i32) -> (i32, i32) {
    %c0_i32 = arith.constant 0 : i32
    %c0_i32_0 = arith.constant 0 : i32
    return %c0_i32, %arg0 : i32, i32
  }
  func.func @transform_2(%arg0: i32, %arg1: i32) -> (i32, i32) {
    %c0_i32 = arith.constant 0 : i32
    %c0_i32_0 = arith.constant 0 : i32
    return %c0_i32, %arg0 : i32, i32
  }
  func.func @transform_3(%arg0: i32, %arg1: i32) -> (i32, i32) {
    %c0_i32 = arith.constant 0 : i32
    return %arg1, %arg0 : i32, i32
  }
}

</mosaic_0001>

<llo_original>
// kernel: tpu_custom_call.1
$region0: #{tpu_custom_call.1}
  #allocation0 [shape = 'u32[]', space=smem, size = 0x4, offset = 0x4, fixed_abs, tag = 'smem constant byte address 0x4 - core index']
  #allocation1 [shape = 'u32[144,128]{1,0:T(1,128)}', space=vmem, size = 0x12000, scoped, tag = 'internal scratch']
  %s0 = inlined_call_operand.vmem [shape: f32[64,32], index: 0, kind: input, shape index: {}]
  %s1 = inlined_call_operand.hbm [shape: f32[32,512], index: 1, kind: input, shape index: {}]
  %s2 = inlined_call_operand.vmem [shape: f32[1,512], index: 2, kind: input, shape index: {}]
  %s3 = inlined_call_operand.hbm [shape: f32[64,512], index: 3, kind: output, shape index: {}]
  %s4 = sld [smem:[#allocation0]]
  $region26: #{tpu_custom_call.1} parent=0
    _
  %s6 = ssub.s32 1, %s4
  %s7 = scalar_select 0, %s6, %s4
  $region1: #{tpu_custom_call.1} parent=0
    #allocation2 [shape = 'u8[65536]{0}', space=vmem, size = 0x10000, scoped, tag = 'input window, operand 1, single buffered']
    #allocation3 [shape = 's32[1]{0}', space=sflag, size = 0x4, scoped, tag = 'scoped memory for tpu_custom_call.1']
    #allocation4 [shape = 's32[1]{0}', space=sflag, size = 0x4, scoped, tag = 'scoped memory for tpu_custom_call.1']
    #allocation5 [shape = 'u8[131072]{0}', space=vmem, size = 0x20000, scoped, tag = 'output window, operand 0, single buffered']
    %8 = vsyncpa [#allocation3], 0
    %9 = vsyncpa [#allocation4], 0
    // Predicated region
    $region2: #{tpu_custom_call.1} parent=1 // pred_check
      _
    $region3: #{tpu_custom_call.1} parent=1 // pred_check_branch
      %11 = sbr.rel (0) target = $region5
    $region4: #{tpu_custom_call.1} parent=1 // pred_region
      _
    $region5: #{tpu_custom_call.1} parent=1 // pred_fallthru
      _
    // Predicated region
    $region6: #{tpu_custom_call.1} parent=1 // pred_check
      _
    $region7: #{tpu_custom_call.1} parent=1 // pred_check_branch
      %13 = sbr.rel (0) target = $region9
    $region8: #{tpu_custom_call.1} parent=1 // pred_region
      %s15 = ssub.s32 2048, 2048
      %16 = vsyncadd [#allocation3], %s15
      %s17 = sshll.u32 [#allocation2], 4
      %s18 = int_to_ptr.vmem [resolvable:$true] %s17
      %23 = dma.hbm_to_vmem [thread:$0]  %s1, 2048, %s18, [#allocation3], 512, 512, 32
    $region9: #{tpu_custom_call.1} parent=1 // pred_fallthru
      _
    // Predicated region
    $region10: #{tpu_custom_call.1} parent=1 // pred_check
      _
    $region11: #{tpu_custom_call.1} parent=1 // pred_check_branch
      %25 = sbr.rel (0) target = $region13
    $region12: #{tpu_custom_call.1} parent=1 // pred_region
      _
    $region13: #{tpu_custom_call.1} parent=1 // pred_fallthru
      _
    // Predicated region
    $region14: #{tpu_custom_call.1} parent=1 // pred_check
      _
    $region15: #{tpu_custom_call.1} parent=1 // pred_check_branch
      %27 = sbr.rel (0) target = $region17
    $region16: #{tpu_custom_call.1} parent=1 // pred_region
      %28 = dma.done [#allocation3], 2048
    $region17: #{tpu_custom_call.1} parent=1 // pred_fallthru
      _
    %v29 = vld [vmem:[%s0] sm:$0xff]
    %v30 = vld [vmem:[%s0 + $0x8] sm:$0xff]
    %v31 = vld [vmem:[%s0 + $0x10] sm:$0xff]
    %v32 = vld [vmem:[%s0 + $0x18] sm:$0xff]
    %v33 = vld [vmem:[%s0 + $0x20] sm:$0xff]
    %v34 = vld [vmem:[%s0 + $0x28] sm:$0xff]
    %v35 = vld [vmem:[%s0 + $0x30] sm:$0xff]
    %v36 = vld [vmem:[%s0 + $0x38] sm:$0xff]
    %v37 = vld [vmem:[#allocation2] sm:$0xff]
    %v38 = vld [vmem:[#allocation2 + $0x8] sm:$0xff]
    %v39 = vld [vmem:[#allocation2 + $0x10] sm:$0xff]
    %v40 = vld [vmem:[#allocation2 + $0x18] sm:$0xff]
    %v41 = vld [vmem:[#allocation2 + $0x20] sm:$0xff]
    %v42 = vld [vmem:[#allocation2 + $0x28] sm:$0xff]
    %v43 = vld [vmem:[#allocation2 + $0x30] sm:$0xff]
    %v44 = vld [vmem:[#allocation2 + $0x38] sm:$0xff]
    %v45 = vld [vmem:[#allocation2 + $0x40] sm:$0xff]
    %v46 = vld [vmem:[#allocation2 + $0x48] sm:$0xff]
    %v47 = vld [vmem:[#allocation2 + $0x50] sm:$0xff]
    %v48 = vld [vmem:[#allocation2 + $0x58] sm:$0xff]
    %v49 = vld [vmem:[#allocation2 + $0x60] sm:$0xff]
    %v50 = vld [vmem:[#allocation2 + $0x68] sm:$0xff]
    %v51 = vld [vmem:[#allocation2 + $0x70] sm:$0xff]
    %v52 = vld [vmem:[#allocation2 + $0x78] sm:$0xff]
    %v53 = vld [vmem:[%s2] sm:$0xf]
    %v55 = vlaneseq
    %v56 = vshrl.u32 %v55, 7
    %v57 = vsub.s32 0, %v56
    %v58 = vrot.slane %v53, %v57
    %v59 = vlaneseq
    %v60 = vshrl.u32 %v59, 7
    %v61 = vsub.s32 1, %v60
    %v62 = vrot.slane %v53, %v61
    %v63 = vlaneseq
    %v64 = vshrl.u32 %v63, 7
    %v65 = vsub.s32 2, %v64
    %v66 = vrot.slane %v53, %v65
    %v67 = vlaneseq
    %v68 = vshrl.u32 %v67, 7
    %v69 = vsub.s32 3, %v68
    %v70 = vrot.slane %v53, %v69
    %vm75 = vcmask 261120
    %v77 = vsel %vm75, %v29, 0
    %v80 = vsel %vm75, %v30, 0
    %v83 = vsel %vm75, %v31, 0
    %v86 = vsel %vm75, %v32, 0
    %v89 = vsel %vm75, %v33, 0
    %v92 = vsel %vm75, %v34, 0
    %v95 = vsel %vm75, %v35, 0
    %v98 = vsel %vm75, %v36, 0
    %100 = vmatprep.subr.mxu0 0.0
    %101 = vmatpush1.msra.mxu0 0.0
    %102 = vmatprep.subr.mxu0 0.0
    %103 = vmatpush1.msra.mxu0 0.0
    %104 = vmatprep.subr.mxu0 0.0
    %105 = vmatpush1.msra.mxu0 0.0
    %106 = vmatprep.subr.mxu0 0.0
    %107 = vmatpush1.msra.mxu0 0.0
    %108 = vmatprep.subr.mxu0 0.0
    %109 = vmatpush1.msra.mxu0 0.0
    %110 = vmatprep.subr.mxu0 0.0
    %111 = vmatpush1.msra.mxu0 0.0
    %112 = vmatprep.subr.mxu0 0.0
    %113 = vmatpush1.msra.mxu0 0.0
    %114 = vmatprep.subr.mxu0 0.0
    %115 = vmatpush1.msra.mxu0 0.0
    %116 = vmatprep.subr.mxu0 0.0
    %117 = vmatpush1.msra.mxu0 0.0
    %118 = vmatprep.subr.mxu0 0.0
    %119 = vmatpush1.msra.mxu0 0.0
    %120 = vmatprep.subr.mxu0 0.0
    %121 = vmatpush1.msra.mxu0 0.0
    %122 = vmatprep.subr.mxu0 0.0
    %123 = vmatpush1.msra.mxu0 0.0
    %124 = vmatprep.subr.mxu0 %v50
    %125 = vmatpush1.msra.mxu0 %v49
    %126 = vmatprep.subr.mxu0 %v46
    %127 = vmatpush1.msra.mxu0 %v45
    %128 = vmatprep.subr.mxu0 %v42
    %129 = vmatpush1.msra.mxu0 %v41
    %130 = vmatprep.subr.mxu0 %v38
    %131 = vmatpush1.msra.mxu0 %v37
    %132 = vmatprep.subr.mxu0 0.0
    %133 = vmatpush2.msra.mxu0 0.0
    %134 = vmatprep.subr.mxu0 0.0
    %135 = vmatpush2.msra.mxu0 0.0
    %136 = vmatprep.subr.mxu0 0.0
    %137 = vmatpush2.msra.mxu0 0.0
    %138 = vmatprep.subr.mxu0 0.0
    %139 = vmatpush2.msra.mxu0 0.0
    %140 = vmatprep.subr.mxu0 0.0
    %141 = vmatpush2.msra.mxu0 0.0
    %142 = vmatprep.subr.mxu0 0.0
    %143 = vmatpush2.msra.mxu0 0.0
    %144 = vmatprep.subr.mxu0 0.0
    %145 = vmatpush2.msra.mxu0 0.0
    %146 = vmatprep.subr.mxu0 0.0
    %147 = vmatpush2.msra.mxu0 0.0
    %148 = vmatprep.subr.mxu0 0.0
    %149 = vmatpush2.msra.mxu0 0.0
    %150 = vmatprep.subr.mxu0 0.0
    %151 = vmatpush2.msra.mxu0 0.0
    %152 = vmatprep.subr.mxu0 0.0
    %153 = vmatpush2.msra.mxu0 0.0
    %154 = vmatprep.subr.mxu0 0.0
    %155 = vmatpush2.msra.mxu0 0.0
    %156 = vmatprep.subr.mxu0 0.0
    %157 = vmatpush2.msra.mxu0 0.0
    %158 = vmatprep.subr.mxu0 0.0
    %159 = vmatpush2.msra.mxu0 0.0
    %160 = vmatprep.subr.mxu0 0.0
    %161 = vmatpush2.msra.mxu0 0.0
    %162 = vmatprep.subr.mxu0 0.0
    %163 = vmatpush2.msra.mxu0 0.0
    %164 = vmatprep.mubr.f32.mxu0 0.0
    %165 = vmatmul.mubr.f32.gmra.mxu0 %v77
    %v166 = vpop.f32.mrf.mxu0
    %v167 = vadd.f32 %v58, %v166
    %v168 = vpop.f32.mrf.mxu0
    %v169 = vadd.f32 %v62, %v168
    %170 = vmatprep.mubr.f32.mxu0 0.0
    %171 = vmatmul.mubr.f32.gmra.mxu0 %v80
    %v172 = vpop.f32.mrf.mxu0
    %v173 = vadd.f32 %v58, %v172
    %v174 = vpop.f32.mrf.mxu0
    %v175 = vadd.f32 %v62, %v174
    %176 = vmatprep.mubr.f32.mxu0 0.0
    %177 = vmatmul.mubr.f32.gmra.mxu0 %v83
    %v178 = vpop.f32.mrf.mxu0
    %v179 = vadd.f32 %v58, %v178
    %v180 = vpop.f32.mrf.mxu0
    %v181 = vadd.f32 %v62, %v180
    %182 = vmatprep.mubr.f32.mxu0 0.0
    %183 = vmatmul.mubr.f32.gmra.mxu0 %v86
    %v184 = vpop.f32.mrf.mxu0
    %v185 = vadd.f32 %v58, %v184
    %v186 = vpop.f32.mrf.mxu0
    %v187 = vadd.f32 %v62, %v186
    %188 = vmatprep.mubr.f32.mxu0 0.0
    %189 = vmatmul.mubr.f32.gmra.mxu0 %v89
    %v190 = vpop.f32.mrf.mxu0
    %v191 = vadd.f32 %v58, %v190
    %v192 = vpop.f32.mrf.mxu0
    %v193 = vadd.f32 %v62, %v192
    %194 = vmatprep.mubr.f32.mxu0 0.0
    %195 = vmatmul.mubr.f32.gmra.mxu0 %v92
    %v196 = vpop.f32.mrf.mxu0
    %v197 = vadd.f32 %v58, %v196
    %v198 = vpop.f32.mrf.mxu0
    %v199 = vadd.f32 %v62, %v198
    %200 = vmatprep.mubr.f32.mxu0 0.0
    %201 = vmatmul.mubr.f32.gmra.mxu0 %v95
    %v202 = vpop.f32.mrf.mxu0
    %v203 = vadd.f32 %v58, %v202
    %v204 = vpop.f32.mrf.mxu0
    %v205 = vadd.f32 %v62, %v204
    %206 = vmatprep.mubr.f32.mxu0 0.0
    %207 = vmatmul.mubr.f32.gmra.mxu0 %v98
    %v208 = vpop.f32.mrf.mxu0
    %v209 = vadd.f32 %v58, %v208
    %v210 = vpop.f32.mrf.mxu0
    %v211 = vadd.f32 %v62, %v210
    %212 = vdwg.mxu0
    %213 = vmatprep.subr.mxu0 0.0
    %214 = vmatpush1.msra.mxu0 0.0
    %215 = vmatprep.subr.mxu0 0.0
    %216 = vmatpush1.msra.mxu0 0.0
    %217 = vmatprep.subr.mxu0 0.0
    %218 = vmatpush1.msra.mxu0 0.0
    %219 = vmatprep.subr.mxu0 0.0
    %220 = vmatpush1.msra.mxu0 0.0
    %221 = vmatprep.subr.mxu0 0.0
    %222 = vmatpush1.msra.mxu0 0.0
    %223 = vmatprep.subr.mxu0 0.0
    %224 = vmatpush1.msra.mxu0 0.0
    %225 = vmatprep.subr.mxu0 0.0
    %226 = vmatpush1.msra.mxu0 0.0
    %227 = vmatprep.subr.mxu0 0.0
    %228 = vmatpush1.msra.mxu0 0.0
    %229 = vmatprep.subr.mxu0 0.0
    %230 = vmatpush1.msra.mxu0 0.0
    %231 = vmatprep.subr.mxu0 0.0
    %232 = vmatpush1.msra.mxu0 0.0
    %233 = vmatprep.subr.mxu0 0.0
    %234 = vmatpush1.msra.mxu0 0.0
    %235 = vmatprep.subr.mxu0 0.0
    %236 = vmatpush1.msra.mxu0 0.0
    %237 = vmatprep.subr.mxu0 %v52
    %238 = vmatpush1.msra.mxu0 %v51
    %239 = vmatprep.subr.mxu0 %v48
    %240 = vmatpush1.msra.mxu0 %v47
    %241 = vmatprep.subr.mxu0 %v44
    %242 = vmatpush1.msra.mxu0 %v43
    %243 = vmatprep.subr.mxu0 %v40
    %244 = vmatpush1.msra.mxu0 %v39
    %245 = vmatprep.subr.mxu0 0.0
    %246 = vmatpush2.msra.mxu0 0.0
    %247 = vmatprep.subr.mxu0 0.0
    %248 = vmatpush2.msra.mxu0 0.0
    %249 = vmatprep.subr.mxu0 0.0
    %250 = vmatpush2.msra.mxu0 0.0
    %251 = vmatprep.subr.mxu0 0.0
    %252 = vmatpush2.msra.mxu0 0.0
    %253 = vmatprep.subr.mxu0 0.0
    %254 = vmatpush2.msra.mxu0 0.0
    %255 = vmatprep.subr.mxu0 0.0
    %256 = vmatpush2.msra.mxu0 0.0
    %257 = vmatprep.subr.mxu0 0.0
    %258 = vmatpush2.msra.mxu0 0.0
    %259 = vmatprep.subr.mxu0 0.0
    %260 = vmatpush2.msra.mxu0 0.0
    %261 = vmatprep.subr.mxu0 0.0
    %262 = vmatpush2.msra.mxu0 0.0
    %263 = vmatprep.subr.mxu0 0.0
    %264 = vmatpush2.msra.mxu0 0.0
    %265 = vmatprep.subr.mxu0 0.0
    %266 = vmatpush2.msra.mxu0 0.0
    %267 = vmatprep.subr.mxu0 0.0
    %268 = vmatpush2.msra.mxu0 0.0
    %269 = vmatprep.subr.mxu0 0.0
    %270 = vmatpush2.msra.mxu0 0.0
    %271 = vmatprep.subr.mxu0 0.0
    %272 = vmatpush2.msra.mxu0 0.0
    %273 = vmatprep.subr.mxu0 0.0
    %274 = vmatpush2.msra.mxu0 0.0
    %275 = vmatprep.subr.mxu0 0.0
    %276 = vmatpush2.msra.mxu0 0.0
    %277 = vmatprep.mubr.f32.mxu0 0.0
    %278 = vmatmul.mubr.f32.gmra.mxu0 %v77
    %v279 = vpop.f32.mrf.mxu0
    %v280 = vadd.f32 %v66, %v279
    %v281 = vpop.f32.mrf.mxu0
    %v282 = vadd.f32 %v70, %v281
    %283 = vmatprep.mubr.f32.mxu0 0.0
    %284 = vmatmul.mubr.f32.gmra.mxu0 %v80
    %v285 = vpop.f32.mrf.mxu0
    %v286 = vadd.f32 %v66, %v285
    %v287 = vpop.f32.mrf.mxu0
    %v288 = vadd.f32 %v70, %v287
    %289 = vmatprep.mubr.f32.mxu0 0.0
    %290 = vmatmul.mubr.f32.gmra.mxu0 %v83
    %v291 = vpop.f32.mrf.mxu0
    %v292 = vadd.f32 %v66, %v291
    %v293 = vpop.f32.mrf.mxu0
    %v294 = vadd.f32 %v70, %v293
    %295 = vmatprep.mubr.f32.mxu0 0.0
    %296 = vmatmul.mubr.f32.gmra.mxu0 %v86
    %v297 = vpop.f32.mrf.mxu0
    %v298 = vadd.f32 %v66, %v297
    %v299 = vpop.f32.mrf.mxu0
    %v300 = vadd.f32 %v70, %v299
    %301 = vmatprep.mubr.f32.mxu0 0.0
    %302 = vmatmul.mubr.f32.gmra.mxu0 %v89
    %v303 = vpop.f32.mrf.mxu0
    %v304 = vadd.f32 %v66, %v303
    %v305 = vpop.f32.mrf.mxu0
    %v306 = vadd.f32 %v70, %v305
    %307 = vmatprep.mubr.f32.mxu0 0.0
    %308 = vmatmul.mubr.f32.gmra.mxu0 %v92
    %v309 = vpop.f32.mrf.mxu0
    %v310 = vadd.f32 %v66, %v309
    %v311 = vpop.f32.mrf.mxu0
    %v312 = vadd.f32 %v70, %v311
    %313 = vmatprep.mubr.f32.mxu0 0.0
    %314 = vmatmul.mubr.f32.gmra.mxu0 %v95
    %v315 = vpop.f32.mrf.mxu0
    %v316 = vadd.f32 %v66, %v315
    %v317 = vpop.f32.mrf.mxu0
    %v318 = vadd.f32 %v70, %v317
    %319 = vmatprep.mubr.f32.mxu0 0.0
    %320 = vmatmul.mubr.f32.gmra.mxu0 %v98
    %v321 = vpop.f32.mrf.mxu0
    %v322 = vadd.f32 %v66, %v321
    %v323 = vpop.f32.mrf.mxu0
    %v324 = vadd.f32 %v70, %v323
    %325 = vdwg.mxu0
    %326 = vst [vmem:[#allocation5] sm:$0xff] %v167
    %327 = vst [vmem:[#allocation5 + $0x8] sm:$0xff] %v169
    %328 = vst [vmem:[#allocation5 + $0x10] sm:$0xff] %v280
    %329 = vst [vmem:[#allocation5 + $0x18] sm:$0xff] %v282
    %330 = vst [vmem:[#allocation5 + $0x20] sm:$0xff] %v173
    %331 = vst [vmem:[#allocation5 + $0x28] sm:$0xff] %v175
    %332 = vst [vmem:[#allocation5 + $0x30] sm:$0xff] %v286
    %333 = vst [vmem:[#allocation5 + $0x38] sm:$0xff] %v288
    %334 = vst [vmem:[#allocation5 + $0x40] sm:$0xff] %v179
    %335 = vst [vmem:[#allocation5 + $0x48] sm:$0xff] %v181
    %336 = vst [vmem:[#allocation5 + $0x50] sm:$0xff] %v292
    %337 = vst [vmem:[#allocation5 + $0x58] sm:$0xff] %v294
    %338 = vst [vmem:[#allocation5 + $0x60] sm:$0xff] %v185
    %339 = vst [vmem:[#allocation5 + $0x68] sm:$0xff] %v187
    %340 = vst [vmem:[#allocation5 + $0x70] sm:$0xff] %v298
    %341 = vst [vmem:[#allocation5 + $0x78] sm:$0xff] %v300
    %342 = vst [vmem:[#allocation5 + $0x80] sm:$0xff] %v191
    %343 = vst [vmem:[#allocation5 + $0x88] sm:$0xff] %v193
    %344 = vst [vmem:[#allocation5 + $0x90] sm:$0xff] %v304
    %345 = vst [vmem:[#allocation5 + $0x98] sm:$0xff] %v306
    %346 = vst [vmem:[#allocation5 + $0xa0] sm:$0xff] %v197
    %347 = vst [vmem:[#allocation5 + $0xa8] sm:$0xff] %v199
    %348 = vst [vmem:[#allocation5 + $0xb0] sm:$0xff] %v310
    %349 = vst [vmem:[#allocation5 + $0xb8] sm:$0xff] %v312
    %350 = vst [vmem:[#allocation5 + $0xc0] sm:$0xff] %v203
    %351 = vst [vmem:[#allocation5 + $0xc8] sm:$0xff] %v205
    %352 = vst [vmem:[#allocation5 + $0xd0] sm:$0xff] %v316
    %353 = vst [vmem:[#allocation5 + $0xd8] sm:$0xff] %v318
    %354 = vst [vmem:[#allocation5 + $0xe0] sm:$0xff] %v209
    %355 = vst [vmem:[#allocation5 + $0xe8] sm:$0xff] %v211
    %356 = vst [vmem:[#allocation5 + $0xf0] sm:$0xff] %v322
    %357 = vst [vmem:[#allocation5 + $0xf8] sm:$0xff] %v324
    // Predicated region
    $region18: #{tpu_custom_call.1} parent=1 // pred_check
      _
    $region19: #{tpu_custom_call.1} parent=1 // pred_check_branch
      %359 = sbr.rel (0) target = $region21
    $region20: #{tpu_custom_call.1} parent=1 // pred_region
      %s361 = ssub.s32 4096, 4096
      %362 = vsyncadd [#allocation4], %s361
      %s363 = sshll.u32 [#allocation5], 4
      %s364 = int_to_ptr.vmem [resolvable:$true] %s363
      %369 = dma.vmem_to_hbm [thread:$0]  %s364, 4096, %s3, [#allocation4], 512, 512, 32
    $region21: #{tpu_custom_call.1} parent=1 // pred_fallthru
      _
    // Predicated region
    $region22: #{tpu_custom_call.1} parent=1 // pred_check
      _
    $region23: #{tpu_custom_call.1} parent=1 // pred_check_branch
      %371 = sbr.rel (0) target = $region25
    $region24: #{tpu_custom_call.1} parent=1 // pred_region
      %372 = dma.done [#allocation4], 4096
    $region25: #{tpu_custom_call.1} parent=1 // pred_fallthru
      _
    %373 = vsyncpa [#allocation3], 1
    %374 = vsyncpa [#allocation4], 1

</llo_original>
